<compile_context>
chip_gen: v6e
topology: v6e:2x2x1
jax: 0.10.0
libtpu: 0.0.40
codegen_flags: <defaults>
</compile_context>

<pallas_src>
import functools

import jax
import jax.numpy as jnp
from jax import lax
from jax.experimental import pallas as pl
from jax.experimental.pallas import tpu as pltpu

EPS = 1e-5
_SUB = 8      # f32 sublane tile
_LANE = 128   # lane tile


def _round_up(a, b):
    return (a + b - 1) // b * b


def _double_conv_bn_relu_kernel(x_ref, w1_ref, w2_ref, mask_ref, o_ref, *, wp, n_valid):
    """Fused Conv3x3 -> BN -> ReLU -> Conv3x3 -> BN -> ReLU on the flat padded grid.

    x_ref    : (Cin_p,  Mp)        f32  conv1 input on the zero-padded flat grid
    w1_ref   : (Cmid_p, 9*Cin_p)   bf16 im2col weight matrix for conv1
    w2_ref   : (Cout_p, 9*Cmid_p)  bf16 im2col weight matrix for conv2
    mask_ref : (1, Mp)             f32  1.0 at interior (valid) positions, else 0
    o_ref    : (Cout_p, Mp)        f32  lane-dense output (interior positions valid)
    """
    f32 = jnp.float32
    mp = x_ref.shape[-1]
    mask = mask_ref[...]                       # (1, Mp)
    inv_n = 1.0 / float(n_valid)

    def conv3x3(a, w_ref):
        # Spatial taps as lane rolls (no relayout copies); interior outputs
        # never read wrapped elements because of the 1-pixel zero border.
        cols = []
        for dy in (-1, 0, 1):
            for dx in (-1, 0, 1):
                s = dy * wp + dx               # read offset on the flat grid
                cols.append(a if s == 0 else pltpu.roll(a, shift=(-s) % mp, axis=1))
        patches = jnp.concatenate(cols, axis=0).astype(jnp.bfloat16)   # (9*C_p, Mp)
        # One fat MXU matmul per conv: bf16 operands, f32 accumulation.
        return jnp.dot(w_ref[...], patches, preferred_element_type=f32)  # (Co_p, Mp)

    def bn_relu(acc):
        # One-pass masked BN stats (training mode, biased variance, eps=1e-5,
        # no affine). Zero-padded channel rows stay exactly zero.
        am = acc * mask
        s = jnp.sum(am, axis=1, keepdims=True)
        ss = jnp.sum(am * acc, axis=1, keepdims=True)
        mean = s * inv_n
        var = jnp.maximum(ss * inv_n - mean * mean, 0.0)
        y = (acc - mean) * lax.rsqrt(var + EPS)
        # The mask multiply discards border/tail garbage AND re-creates conv2's
        # zero padding in place (no scratch re-pad, no misaligned stores).
        return jnp.maximum(y, 0.0) * mask

    h1 = bn_relu(conv3x3(x_ref[...], w1_ref))               # (Cmid_p, Mp) f32
    o_ref[...] = bn_relu(conv3x3(h1, w2_ref)).astype(o_ref.dtype)


def _pack_weight(w_hwio, cin_p, cout_p):
    """(3, 3, Cin, Cout) HWIO -> (Cout_p, 9*Cin_p) im2col weight matrix, bf16."""
    kh, kw, cin, cout = w_hwio.shape
    w = jnp.pad(w_hwio, ((0, 0), (0, 0), (0, cin_p - cin), (0, cout_p - cout)))
    w = jnp.transpose(w, (3, 0, 1, 2)).reshape(cout_p, kh * kw * cin_p)
    return w.astype(jnp.bfloat16)


def down_block_forward(x_nchw, w1_hwio, w2_hwio):
    """down_block forward. Inputs/outputs use PyTorch NCHW convention."""
    N, Cin, H, W = x_nchw.shape
    Cmid = w1_hwio.shape[-1]
    Cout = w2_hwio.shape[-1]
    Hp, Wp = H + 2, W + 2
    M = N * Hp * Wp
    Mp = _round_up(M, _LANE)
    Cin_p = _round_up(Cin, _SUB)
    Cmid_p = _round_up(Cmid, _SUB)
    Cout_p = _round_up(Cout, _SUB)

    # ---- layout prep (glue): channels -> sublanes, flat padded spatial -> lanes
    x = jnp.transpose(x_nchw, (1, 0, 2, 3)).astype(jnp.float32)   # (Cin, N, H, W)
    x = jnp.pad(x, ((0, Cin_p - Cin), (0, 0), (1, 1), (1, 1)))    # conv1 zero pad
    x = x.reshape(Cin_p, M)
    x = jnp.pad(x, ((0, 0), (0, Mp - M)))                         # lane-align

    w1m = _pack_weight(w1_hwio, Cin_p, Cmid_p)     # (Cmid_p, 9*Cin_p) bf16
    w2m = _pack_weight(w2_hwio, Cmid_p, Cout_p)    # (Cout_p, 9*Cmid_p) bf16

    # Interior-position mask over the flat padded (and lane-padded) grid.
    pos = jnp.arange(Mp)
    rem = pos % (Hp * Wp)
    yp, xp = rem // Wp, rem % Wp
    interior = (pos < M) & (yp >= 1) & (yp <= H) & (xp >= 1) & (xp <= W)
    mask = interior.astype(jnp.float32)[None, :]   # (1, Mp)

    kernel = functools.partial(_double_conv_bn_relu_kernel, wp=Wp, n_valid=N * H * W)

    y_flat = pl.pallas_call(
        kernel,
        out_shape=jax.ShapeDtypeStruct((Cout_p, Mp), jnp.float32),
        grid=(1,),   # tiny problem: whole batch resident in VMEM for one step
        in_specs=[
            pl.BlockSpec((Cin_p, Mp), lambda i: (0, 0)),
            pl.BlockSpec((Cmid_p, 9 * Cin_p), lambda i: (0, 0)),
            pl.BlockSpec((Cout_p, 9 * Cmid_p), lambda i: (0, 0)),
            pl.BlockSpec((1, Mp), lambda i: (0, 0)),
        ],
        out_specs=pl.BlockSpec((Cout_p, Mp), lambda i: (0, 0)),   # lane-dense store
        compiler_params=pltpu.CompilerParams(dimension_semantics=("arbitrary",)),
    )(x, w1m, w2m, mask)

    # ---- un-flatten, crop the halo, 2x2 max-pool, back to NCHW (glue)
    # TODO(synk): MaxPool2d(2) and the NCHW<->lane-flat transposes stay as
    # wrapper-side XLA glue; the conv/BN/ReLU hot path is inside the kernel.
    y = y_flat[:Cout, :M].reshape(Cout, N, Hp, Wp)[:, :, 1:1 + H, 1:1 + W]
    Ho, Wo = H // 2, W // 2
    y = y[:, :, :2 * Ho, :2 * Wo].reshape(Cout, N, Ho, 2, Wo, 2).max(axis=(3, 5))
    return jnp.transpose(y, (1, 0, 2, 3))   # (N, Cout, H/2, W/2)


def _reference(x_nchw, w1_hwio, w2_hwio):
    """Pure-JAX reference (lax.conv at HIGHEST precision) for correctness."""
    x = jnp.transpose(x_nchw, (0, 2, 3, 1)).astype(jnp.float32)   # NHWC

    def conv_bn_relu(x, w):
        y = lax.conv_general_dilated(
            x, w, window_strides=(1, 1), padding=((1, 1), (1, 1)),
            dimension_numbers=("NHWC", "HWIO", "NHWC"),
            precision=lax.Precision.HIGHEST)
        mean = jnp.mean(y, axis=(0, 1, 2), keepdims=True)
        var = jnp.mean(jnp.square(y - mean), axis=(0, 1, 2), keepdims=True)
        return jnp.maximum((y - mean) * lax.rsqrt(var + EPS), 0.0)

    y = conv_bn_relu(x, w1_hwio)
    y = conv_bn_relu(y, w2_hwio)
    N, H, W, C = y.shape
    Ho, Wo = H // 2, W // 2
    y = y[:, :2 * Ho, :2 * Wo, :].reshape(N, Ho, 2, Wo, 2, C).max(axis=(2, 4))
    return jnp.transpose(y, (0, 3, 1, 2))


if __name__ == "__main__":
    key = jax.random.PRNGKey(0)
    k1, k2, k3 = jax.random.split(key, 3)

    # down_block(in_channels=4, out_channels=8)
    in_channels, out_channels = 4, 8
    N, H, W = 2, 16, 16

    x = jax.random.normal(k1, (N, in_channels, H, W), jnp.float32)
    # Deterministic synthetic weights (HWIO layout), per DoubleConvBlock:
    #   conv1: in_channels -> out_channels, 3x3, no bias
    #   conv2: out_channels -> out_channels, 3x3, no bias
    w1 = jax.random.normal(k2, (3, 3, in_channels, out_channels), jnp.float32) \
        / jnp.sqrt(9.0 * in_channels)
    w2 = jax.random.normal(k3, (3, 3, out_channels, out_channels), jnp.float32) \
        / jnp.sqrt(9.0 * out_channels)

    y = down_block_forward(x, w1, w2)
    jax.block_until_ready(y)

    assert y.shape == (N, out_channels, H // 2, W // 2), y.shape

    y_ref = _reference(x, w1, w2)
    max_err = float(jnp.max(jnp.abs(y - y_ref)))
    # Tolerance reflects bf16 MXU operands (f32 accumulation) vs. the f32
    # HIGHEST-precision reference.
    assert jnp.allclose(y, y_ref, atol=4e-2, rtol=4e-2), f"max abs err = {max_err}"

    print("KERNEL_OK")
</pallas_src>

<mosaic_0001>
module attributes {stable_mosaic.version = 11 : i64} {
  func.func @_double_conv_bn_relu_kernel(%arg0: i32, %arg1: memref<8x768xf32, #tpu.memory_space<vmem>>, %arg2: memref<8x72xbf16, #tpu.memory_space<vmem>>, %arg3: memref<8x72xbf16, #tpu.memory_space<vmem>>, %arg4: memref<1x768xf32, #tpu.memory_space<vmem>>, %arg5: memref<8x768xf32, #tpu.memory_space<vmem>>) attributes {dimension_semantics = [#tpu.dimension_semantics<arbitrary>], iteration_bounds = array<i64: 1>, scalar_prefetch = 0 : i64, scratch_operands = 0 : i64, tpu.core_type = #tpu.core_type<tc>, window_params = [{pipeline_mode = #tpu.pipeline_mode<synchronous>, transform_indices = @transform_0, window_bounds = array<i64: 8, 768>}, {pipeline_mode = #tpu.pipeline_mode<synchronous>, transform_indices = @transform_1, window_bounds = array<i64: 8, 72>}, {pipeline_mode = #tpu.pipeline_mode<synchronous>, transform_indices = @transform_2, window_bounds = array<i64: 8, 72>}, {pipeline_mode = #tpu.pipeline_mode<synchronous>, transform_indices = @transform_3, window_bounds = array<i64: 1, 768>}, {pipeline_mode = #tpu.pipeline_mode<synchronous>, transform_indices = @transform_4, window_bounds = array<i64: 8, 768>}]} {
    %c0 = arith.constant 0 : index
    %c0_0 = arith.constant 0 : index
    %0 = vector.load %arg4[%c0, %c0_0] : memref<1x768xf32, #tpu.memory_space<vmem>>, vector<1x768xf32>
    %c0_1 = arith.constant 0 : index
    %c0_2 = arith.constant 0 : index
    %1 = vector.load %arg1[%c0_1, %c0_2] : memref<8x768xf32, #tpu.memory_space<vmem>>, vector<8x768xf32>
    %c19_i32 = arith.constant 19 : i32
    %2 = tpu.dynamic_rotate %1 by %c19_i32 dim 1 : vector<8x768xf32>, i32 -> vector<8x768xf32>
    %c18_i32 = arith.constant 18 : i32
    %3 = tpu.dynamic_rotate %1 by %c18_i32 dim 1 : vector<8x768xf32>, i32 -> vector<8x768xf32>
    %c17_i32 = arith.constant 17 : i32
    %4 = tpu.dynamic_rotate %1 by %c17_i32 dim 1 : vector<8x768xf32>, i32 -> vector<8x768xf32>
    %c1_i32 = arith.constant 1 : i32
    %5 = tpu.dynamic_rotate %1 by %c1_i32 dim 1 : vector<8x768xf32>, i32 -> vector<8x768xf32>
    %c767_i32 = arith.constant 767 : i32
    %6 = tpu.dynamic_rotate %1 by %c767_i32 dim 1 : vector<8x768xf32>, i32 -> vector<8x768xf32>
    %c751_i32 = arith.constant 751 : i32
    %7 = tpu.dynamic_rotate %1 by %c751_i32 dim 1 : vector<8x768xf32>, i32 -> vector<8x768xf32>
    %c750_i32 = arith.constant 750 : i32
    %8 = tpu.dynamic_rotate %1 by %c750_i32 dim 1 : vector<8x768xf32>, i32 -> vector<8x768xf32>
    %c749_i32 = arith.constant 749 : i32
    %9 = tpu.dynamic_rotate %1 by %c749_i32 dim 1 : vector<8x768xf32>, i32 -> vector<8x768xf32>
    %10 = tpu.concatenate %2, %3, %4, %5, %1, %6, %7, %8, %9 in 0 : vector<8x768xf32>, vector<8x768xf32>, vector<8x768xf32>, vector<8x768xf32>, vector<8x768xf32>, vector<8x768xf32>, vector<8x768xf32>, vector<8x768xf32>, vector<8x768xf32> -> vector<72x768xf32>
    %11 = arith.truncf %10 : vector<72x768xf32> to vector<72x768xbf16>
    %c0_3 = arith.constant 0 : index
    %c0_4 = arith.constant 0 : index
    %12 = vector.load %arg2[%c0_3, %c0_4] : memref<8x72xbf16, #tpu.memory_space<vmem>>, vector<8x72xbf16>
    %cst = arith.constant dense<0.000000e+00> : vector<8x768xf32>
    %13 = tpu.matmul %12, %11, %cst {dimension_numbers = #tpu.dot_dimension_numbers<[1], [0], [0], [1], [0, 0, 1, 1], [], []>} : vector<8x72xbf16>, vector<72x768xbf16>, vector<8x768xf32> -> vector<8x768xf32>
    %14 = vector.broadcast %0 : vector<1x768xf32> to vector<8x768xf32>
    %15 = arith.mulf %13, %14 : vector<8x768xf32>
    %cst_5 = arith.constant dense<0.000000e+00> : vector<8xf32>
    %16 = vector.multi_reduction <add>, %15, %cst_5 [1] : vector<8x768xf32> to vector<8xf32>
    %17 = vector.shape_cast %16 : vector<8xf32> to vector<8x1xf32>
    %18 = arith.mulf %15, %13 : vector<8x768xf32>
    %cst_6 = arith.constant dense<0.000000e+00> : vector<8xf32>
    %19 = vector.multi_reduction <add>, %18, %cst_6 [1] : vector<8x768xf32> to vector<8xf32>
    %20 = vector.shape_cast %19 : vector<8xf32> to vector<8x1xf32>
    %cst_7 = arith.constant 0.001953125 : f32
    %21 = vector.broadcast %cst_7 : f32 to vector<8x1xf32>
    %22 = arith.mulf %17, %21 : vector<8x1xf32>
    %cst_8 = arith.constant 0.001953125 : f32
    %23 = vector.broadcast %cst_8 : f32 to vector<8x1xf32>
    %24 = arith.mulf %20, %23 : vector<8x1xf32>
    %25 = arith.mulf %22, %22 : vector<8x1xf32>
    %26 = arith.subf %24, %25 : vector<8x1xf32>
    %cst_9 = arith.constant 0.000000e+00 : f32
    %27 = vector.broadcast %cst_9 : f32 to vector<8x1xf32>
    %28 = arith.maximumf %26, %27 : vector<8x1xf32>
    %29 = vector.broadcast %22 : vector<8x1xf32> to vector<8x768xf32>
    %30 = arith.subf %13, %29 : vector<8x768xf32>
    %cst_10 = arith.constant 9.99999974E-6 : f32
    %31 = vector.broadcast %cst_10 : f32 to vector<8x1xf32>
    %32 = arith.addf %28, %31 : vector<8x1xf32>
    %33 = math.rsqrt %32 : vector<8x1xf32>
    %34 = vector.broadcast %33 : vector<8x1xf32> to vector<8x768xf32>
    %35 = arith.mulf %30, %34 : vector<8x768xf32>
    %cst_11 = arith.constant 0.000000e+00 : f32
    %36 = vector.broadcast %cst_11 : f32 to vector<8x768xf32>
    %37 = arith.maximumf %35, %36 : vector<8x768xf32>
    %38 = vector.broadcast %0 : vector<1x768xf32> to vector<8x768xf32>
    %39 = arith.mulf %37, %38 : vector<8x768xf32>
    %c19_i32_12 = arith.constant 19 : i32
    %40 = tpu.dynamic_rotate %39 by %c19_i32_12 dim 1 : vector<8x768xf32>, i32 -> vector<8x768xf32>
    %c18_i32_13 = arith.constant 18 : i32
    %41 = tpu.dynamic_rotate %39 by %c18_i32_13 dim 1 : vector<8x768xf32>, i32 -> vector<8x768xf32>
    %c17_i32_14 = arith.constant 17 : i32
    %42 = tpu.dynamic_rotate %39 by %c17_i32_14 dim 1 : vector<8x768xf32>, i32 -> vector<8x768xf32>
    %c1_i32_15 = arith.constant 1 : i32
    %43 = tpu.dynamic_rotate %39 by %c1_i32_15 dim 1 : vector<8x768xf32>, i32 -> vector<8x768xf32>
    %c767_i32_16 = arith.constant 767 : i32
    %44 = tpu.dynamic_rotate %39 by %c767_i32_16 dim 1 : vector<8x768xf32>, i32 -> vector<8x768xf32>
    %c751_i32_17 = arith.constant 751 : i32
    %45 = tpu.dynamic_rotate %39 by %c751_i32_17 dim 1 : vector<8x768xf32>, i32 -> vector<8x768xf32>
    %c750_i32_18 = arith.constant 750 : i32
    %46 = tpu.dynamic_rotate %39 by %c750_i32_18 dim 1 : vector<8x768xf32>, i32 -> vector<8x768xf32>
    %c749_i32_19 = arith.constant 749 : i32
    %47 = tpu.dynamic_rotate %39 by %c749_i32_19 dim 1 : vector<8x768xf32>, i32 -> vector<8x768xf32>
    %48 = tpu.concatenate %40, %41, %42, %43, %39, %44, %45, %46, %47 in 0 : vector<8x768xf32>, vector<8x768xf32>, vector<8x768xf32>, vector<8x768xf32>, vector<8x768xf32>, vector<8x768xf32>, vector<8x768xf32>, vector<8x768xf32>, vector<8x768xf32> -> vector<72x768xf32>
    %49 = arith.truncf %48 : vector<72x768xf32> to vector<72x768xbf16>
    %c0_20 = arith.constant 0 : index
    %c0_21 = arith.constant 0 : index
    %50 = vector.load %arg3[%c0_20, %c0_21] : memref<8x72xbf16, #tpu.memory_space<vmem>>, vector<8x72xbf16>
    %cst_22 = arith.constant dense<0.000000e+00> : vector<8x768xf32>
    %51 = tpu.matmul %50, %49, %cst_22 {dimension_numbers = #tpu.dot_dimension_numbers<[1], [0], [0], [1], [0, 0, 1, 1], [], []>} : vector<8x72xbf16>, vector<72x768xbf16>, vector<8x768xf32> -> vector<8x768xf32>
    %52 = vector.broadcast %0 : vector<1x768xf32> to vector<8x768xf32>
    %53 = arith.mulf %51, %52 : vector<8x768xf32>
    %cst_23 = arith.constant dense<0.000000e+00> : vector<8xf32>
    %54 = vector.multi_reduction <add>, %53, %cst_23 [1] : vector<8x768xf32> to vector<8xf32>
    %55 = vector.shape_cast %54 : vector<8xf32> to vector<8x1xf32>
    %56 = arith.mulf %53, %51 : vector<8x768xf32>
    %cst_24 = arith.constant dense<0.000000e+00> : vector<8xf32>
    %57 = vector.multi_reduction <add>, %56, %cst_24 [1] : vector<8x768xf32> to vector<8xf32>
    %58 = vector.shape_cast %57 : vector<8xf32> to vector<8x1xf32>
    %cst_25 = arith.constant 0.001953125 : f32
    %59 = vector.broadcast %cst_25 : f32 to vector<8x1xf32>
    %60 = arith.mulf %55, %59 : vector<8x1xf32>
    %cst_26 = arith.constant 0.001953125 : f32
    %61 = vector.broadcast %cst_26 : f32 to vector<8x1xf32>
    %62 = arith.mulf %58, %61 : vector<8x1xf32>
    %63 = arith.mulf %60, %60 : vector<8x1xf32>
    %64 = arith.subf %62, %63 : vector<8x1xf32>
    %cst_27 = arith.constant 0.000000e+00 : f32
    %65 = vector.broadcast %cst_27 : f32 to vector<8x1xf32>
    %66 = arith.maximumf %64, %65 : vector<8x1xf32>
    %67 = vector.broadcast %60 : vector<8x1xf32> to vector<8x768xf32>
    %68 = arith.subf %51, %67 : vector<8x768xf32>
    %cst_28 = arith.constant 9.99999974E-6 : f32
    %69 = vector.broadcast %cst_28 : f32 to vector<8x1xf32>
    %70 = arith.addf %66, %69 : vector<8x1xf32>
    %71 = math.rsqrt %70 : vector<8x1xf32>
    %72 = vector.broadcast %71 : vector<8x1xf32> to vector<8x768xf32>
    %73 = arith.mulf %68, %72 : vector<8x768xf32>
    %cst_29 = arith.constant 0.000000e+00 : f32
    %74 = vector.broadcast %cst_29 : f32 to vector<8x768xf32>
    %75 = arith.maximumf %73, %74 : vector<8x768xf32>
    %76 = vector.broadcast %0 : vector<1x768xf32> to vector<8x768xf32>
    %77 = arith.mulf %75, %76 : vector<8x768xf32>
    %c0_30 = arith.constant 0 : index
    %c0_31 = arith.constant 0 : index
    %78 = vector.load %arg5[%c0_30, %c0_31] : memref<8x768xf32, #tpu.memory_space<vmem>>, vector<8x768xf32>
    tpu.vector_store %arg5[%c0_30, %c0_31], %77 {strides = array<i32>} : memref<8x768xf32, #tpu.memory_space<vmem>>, vector<8x768xf32>,
    return
  }
  func.func @transform_0(%arg0: i32) -> (i32, i32) {
    %c0_i32 = arith.constant 0 : i32
    %c0_i32_0 = arith.constant 0 : i32
    %c0_i32_1 = arith.constant 0 : i32
    return %c0_i32, %c0_i32_0 : i32, i32
  }
  func.func @transform_1(%arg0: i32) -> (i32, i32) {
    %c0_i32 = arith.constant 0 : i32
    %c0_i32_0 = arith.constant 0 : i32
    %c0_i32_1 = arith.constant 0 : i32
    return %c0_i32, %c0_i32_0 : i32, i32
  }
  func.func @transform_2(%arg0: i32) -> (i32, i32) {
    %c0_i32 = arith.constant 0 : i32
    %c0_i32_0 = arith.constant 0 : i32
    %c0_i32_1 = arith.constant 0 : i32
    return %c0_i32, %c0_i32_0 : i32, i32
  }
  func.func @transform_3(%arg0: i32) -> (i32, i32) {
    %c0_i32 = arith.constant 0 : i32
    %c0_i32_0 = arith.constant 0 : i32
    %c0_i32_1 = arith.constant 0 : i32
    return %c0_i32, %c0_i32_0 : i32, i32
  }
  func.func @transform_4(%arg0: i32) -> (i32, i32) {
    %c0_i32 = arith.constant 0 : i32
    %c0_i32_0 = arith.constant 0 : i32
    %c0_i32_1 = arith.constant 0 : i32
    return %c0_i32, %c0_i32_0 : i32, i32
  }
}

</mosaic_0001>

<llo_original>
// kernel: tpu_custom_call.1
$region0: #{tpu_custom_call.1}
  #allocation0 [shape = 'u32[]', space=smem, size = 0x4, offset = 0x4, fixed_abs, tag = 'smem constant byte address 0x4 - core index']
  #allocation1 [shape = 'u32[144,128]{1,0:T(1,128)}', space=vmem, size = 0x12000, scoped, tag = 'internal scratch']
  %s0 = inlined_call_operand.hbm [shape: f32[8,768], index: 0, kind: input, shape index: {}]
  %s1 = inlined_call_operand.hbm [shape: bf16[8,72], index: 1, kind: input, shape index: {}]
  %s2 = inlined_call_operand.hbm [shape: bf16[8,72], index: 2, kind: input, shape index: {}]
  %s3 = inlined_call_operand.hbm [shape: f32[1,768], index: 3, kind: input, shape index: {}]
  %s4 = inlined_call_operand.hbm [shape: f32[8,768], index: 4, kind: output, shape index: {}]
  %s5 = sld [smem:[#allocation0]]
  $region42: #{tpu_custom_call.1} parent=0
    _
  %s7 = ssub.s32 1, %s5
  %s8 = scalar_select 0, %s7, %s5
  $region1: #{tpu_custom_call.1} parent=0
    #allocation2 [shape = 'u8[24576]{0}', space=vmem, size = 0x6000, scoped, tag = 'input window, operand 0, single buffered']
    #allocation3 [shape = 's32[1]{0}', space=sflag, size = 0x4, scoped, tag = 'scoped memory for tpu_custom_call.1']
    #allocation4 [shape = 's32[1]{0}', space=sflag, size = 0x4, scoped, tag = 'scoped memory for tpu_custom_call.1']
    #allocation5 [shape = 'u8[2048]{0}', space=vmem, size = 0x800, scoped, tag = 'input window, operand 1, single buffered']
    #allocation6 [shape = 's32[1]{0}', space=sflag, size = 0x4, scoped, tag = 'scoped memory for tpu_custom_call.1']
    #allocation7 [shape = 'u8[2048]{0}', space=vmem, size = 0x800, scoped, tag = 'input window, operand 2, single buffered']
    #allocation8 [shape = 'u8[3072]{0}', space=vmem, size = 0xc00, scoped, tag = 'input window, operand 3, single buffered']
    #allocation9 [shape = 's32[1]{0}', space=sflag, size = 0x4, scoped, tag = 'scoped memory for tpu_custom_call.1']
    #allocation10 [shape = 'u8[24576]{0}', space=vmem, size = 0x6000, scoped, tag = 'output window, operand 0, single buffered']
    %9 = vsyncpa [#allocation3], 0
    %10 = vsyncpa [#allocation6], 0
    %11 = vsyncpa [#allocation9], 0
    %12 = vsyncpa [#allocation4], 0
    // Predicated region
    $region2: #{tpu_custom_call.1} parent=1 // pred_check
      _
    $region3: #{tpu_custom_call.1} parent=1 // pred_check_branch
      %14 = sbr.rel (0) target = $region5
    $region4: #{tpu_custom_call.1} parent=1 // pred_region
      %s16 = ssub.s32 768, 768
      %17 = vsyncadd [#allocation3], %s16
      %s19 = sshll.u32 [#allocation2], 4
      %s20 = int_to_ptr.vmem [resolvable:$true] %s19
      %22 = dma.hbm_to_vmem [thread:$0]  %s0, 768, %s20, [#allocation3]
    $region5: #{tpu_custom_call.1} parent=1 // pred_fallthru
      _
    // Predicated region
    $region6: #{tpu_custom_call.1} parent=1 // pred_check
      _
    $region7: #{tpu_custom_call.1} parent=1 // pred_check_branch
      %24 = sbr.rel (0) target = $region9
    $region8: #{tpu_custom_call.1} parent=1 // pred_region
      %s26 = ssub.s32 64, 64
      %27 = vsyncadd [#allocation6], %s26
      %s29 = sshll.u32 [#allocation5], 4
      %s30 = int_to_ptr.vmem [resolvable:$true] %s29
      %32 = dma.hbm_to_vmem [thread:$0]  %s1, 64, %s30, [#allocation6]
    $region9: #{tpu_custom_call.1} parent=1 // pred_fallthru
      _
    // Predicated region
    $region10: #{tpu_custom_call.1} parent=1 // pred_check
      _
    $region11: #{tpu_custom_call.1} parent=1 // pred_check_branch
      %34 = sbr.rel (0) target = $region13
    $region12: #{tpu_custom_call.1} parent=1 // pred_region
      %s36 = ssub.s32 64, 64
      %37 = vsyncadd [#allocation6], %s36
      %s39 = sshll.u32 [#allocation7], 4
      %s40 = int_to_ptr.vmem [resolvable:$true] %s39
      %42 = dma.hbm_to_vmem [thread:$0]  %s2, 64, %s40, [#allocation6]
    $region13: #{tpu_custom_call.1} parent=1 // pred_fallthru
      _
    // Predicated region
    $region14: #{tpu_custom_call.1} parent=1 // pred_check
      _
    $region15: #{tpu_custom_call.1} parent=1 // pred_check_branch
      %44 = sbr.rel (0) target = $region17
    $region16: #{tpu_custom_call.1} parent=1 // pred_region
      %s46 = ssub.s32 96, 96
      %47 = vsyncadd [#allocation9], %s46
      %s49 = sshll.u32 [#allocation8], 4
      %s50 = int_to_ptr.vmem [resolvable:$true] %s49
      %52 = dma.hbm_to_vmem [thread:$0]  %s3, 96, %s50, [#allocation9]
    $region17: #{tpu_custom_call.1} parent=1 // pred_fallthru
      _
    // Predicated region
    $region18: #{tpu_custom_call.1} parent=1 // pred_check
      _
    $region19: #{tpu_custom_call.1} parent=1 // pred_check_branch
      %54 = sbr.rel (0) target = $region21
    $region20: #{tpu_custom_call.1} parent=1 // pred_region
      %55 = dma.done [#allocation3], 768
    $region21: #{tpu_custom_call.1} parent=1 // pred_fallthru
      _
    // Predicated region
    $region22: #{tpu_custom_call.1} parent=1 // pred_check
      _
    $region23: #{tpu_custom_call.1} parent=1 // pred_check_branch
      %57 = sbr.rel (0) target = $region25
    $region24: #{tpu_custom_call.1} parent=1 // pred_region
      %58 = dma.done [#allocation6], 64
    $region25: #{tpu_custom_call.1} parent=1 // pred_fallthru
      _
    // Predicated region
    $region26: #{tpu_custom_call.1} parent=1 // pred_check
      _
    $region27: #{tpu_custom_call.1} parent=1 // pred_check_branch
      %60 = sbr.rel (0) target = $region29
    $region28: #{tpu_custom_call.1} parent=1 // pred_region
      %61 = dma.done [#allocation6], 64
    $region29: #{tpu_custom_call.1} parent=1 // pred_fallthru
      _
    // Predicated region
    $region30: #{tpu_custom_call.1} parent=1 // pred_check
      _
    $region31: #{tpu_custom_call.1} parent=1 // pred_check_branch
      %63 = sbr.rel (0) target = $region33
    $region32: #{tpu_custom_call.1} parent=1 // pred_region
      %64 = dma.done [#allocation9], 96
    $region33: #{tpu_custom_call.1} parent=1 // pred_fallthru
      _
    %v66 = vld [vmem:[#allocation8] sm:$0x3f]
    %v67 = vld [vmem:[#allocation2] sm:$0xff]
    %v68 = vld [vmem:[#allocation2 + $0x8] sm:$0xff]
    %v69 = vld [vmem:[#allocation2 + $0x10] sm:$0xff]
    %v70 = vld [vmem:[#allocation2 + $0x18] sm:$0xff]
    %v71 = vld [vmem:[#allocation2 + $0x20] sm:$0xff]
    %v72 = vld [vmem:[#allocation2 + $0x28] sm:$0xff]
    %73 = vrot.lane.b32.xlu0 %v67, 19
    %v74 = vpop.permute.xlu0 %73
    %75 = vrot.lane.b32.xlu0 %v68, 19
    %v76 = vpop.permute.xlu0 %75
    %77 = vrot.lane.b32.xlu0 %v69, 19
    %v78 = vpop.permute.xlu0 %77
    %79 = vrot.lane.b32.xlu0 %v70, 19
    %v80 = vpop.permute.xlu0 %79
    %81 = vrot.lane.b32.xlu0 %v71, 19
    %v82 = vpop.permute.xlu0 %81
    %83 = vrot.lane.b32.xlu0 %v72, 19
    %v84 = vpop.permute.xlu0 %83
    %v85 = vlaneseq
    %v86 = vand.u32 %v85, 127
    %vm87 = vcmp.lt.s32.totalorder %v86, 19
    %v88 = vsel %vm87, %v82, %v84
    %v89 = vsel %vm87, %v80, %v82
    %v90 = vsel %vm87, %v78, %v80
    %v91 = vsel %vm87, %v76, %v78
    %v92 = vsel %vm87, %v74, %v76
    %v93 = vsel %vm87, %v84, %v74
    %94 = vrot.lane.b32.xlu0 %v67, 18
    %v95 = vpop.permute.xlu0 %94
    %96 = vrot.lane.b32.xlu0 %v68, 18
    %v97 = vpop.permute.xlu0 %96
    %98 = vrot.lane.b32.xlu0 %v69, 18
    %v99 = vpop.permute.xlu0 %98
    %100 = vrot.lane.b32.xlu0 %v70, 18
    %v101 = vpop.permute.xlu0 %100
    %102 = vrot.lane.b32.xlu0 %v71, 18
    %v103 = vpop.permute.xlu0 %102
    %104 = vrot.lane.b32.xlu0 %v72, 18
    %v105 = vpop.permute.xlu0 %104
    %vm106 = vcmp.lt.s32.totalorder %v86, 18
    %v107 = vsel %vm106, %v103, %v105
    %v108 = vsel %vm106, %v101, %v103
    %v109 = vsel %vm106, %v99, %v101
    %v110 = vsel %vm106, %v97, %v99
    %v111 = vsel %vm106, %v95, %v97
    %v112 = vsel %vm106, %v105, %v95
    %113 = vrot.lane.b32.xlu0 %v67, 17
    %v114 = vpop.permute.xlu0 %113
    %115 = vrot.lane.b32.xlu0 %v68, 17
    %v116 = vpop.permute.xlu0 %115
    %117 = vrot.lane.b32.xlu0 %v69, 17
    %v118 = vpop.permute.xlu0 %117
    %119 = vrot.lane.b32.xlu0 %v70, 17
    %v120 = vpop.permute.xlu0 %119
    %121 = vrot.lane.b32.xlu0 %v71, 17
    %v122 = vpop.permute.xlu0 %121
    %123 = vrot.lane.b32.xlu0 %v72, 17
    %v124 = vpop.permute.xlu0 %123
    %vm125 = vcmp.lt.s32.totalorder %v86, 17
    %v126 = vsel %vm125, %v122, %v124
    %v127 = vsel %vm125, %v120, %v122
    %v128 = vsel %vm125, %v118, %v120
    %v129 = vsel %vm125, %v116, %v118
    %v130 = vsel %vm125, %v114, %v116
    %v131 = vsel %vm125, %v124, %v114
    %132 = vrot.lane.b32.xlu0 %v67, 1
    %v133 = vpop.permute.xlu0 %132
    %134 = vrot.lane.b32.xlu0 %v68, 1
    %v135 = vpop.permute.xlu0 %134
    %136 = vrot.lane.b32.xlu0 %v69, 1
    %v137 = vpop.permute.xlu0 %136
    %138 = vrot.lane.b32.xlu0 %v70, 1
    %v139 = vpop.permute.xlu0 %138
    %140 = vrot.lane.b32.xlu0 %v71, 1
    %v141 = vpop.permute.xlu0 %140
    %142 = vrot.lane.b32.xlu0 %v72, 1
    %v143 = vpop.permute.xlu0 %142
    %vm144 = vcmp.lt.s32.totalorder %v86, 1
    %v145 = vsel %vm144, %v141, %v143
    %v146 = vsel %vm144, %v139, %v141
    %v147 = vsel %vm144, %v137, %v139
    %v148 = vsel %vm144, %v135, %v137
    %v149 = vsel %vm144, %v133, %v135
    %v150 = vsel %vm144, %v143, %v133
    %151 = vrot.lane.b32.xlu0 %v67, 127
    %v152 = vpop.permute.xlu0 %151
    %153 = vrot.lane.b32.xlu0 %v68, 127
    %v154 = vpop.permute.xlu0 %153
    %155 = vrot.lane.b32.xlu0 %v69, 127
    %v156 = vpop.permute.xlu0 %155
    %157 = vrot.lane.b32.xlu0 %v70, 127
    %v158 = vpop.permute.xlu0 %157
    %159 = vrot.lane.b32.xlu0 %v71, 127
    %v160 = vpop.permute.xlu0 %159
    %161 = vrot.lane.b32.xlu0 %v72, 127
    %v162 = vpop.permute.xlu0 %161
    %vm163 = vcmp.lt.s32.totalorder %v86, 127
    %v164 = vsel %vm163, %v160, %v162
    %v165 = vsel %vm163, %v158, %v160
    %v166 = vsel %vm163, %v156, %v158
    %v167 = vsel %vm163, %v154, %v156
    %v168 = vsel %vm163, %v152, %v154
    %v169 = vsel %vm163, %v162, %v152
    %170 = vrot.lane.b32.xlu0 %v67, 111
    %v171 = vpop.permute.xlu0 %170
    %172 = vrot.lane.b32.xlu0 %v68, 111
    %v173 = vpop.permute.xlu0 %172
    %174 = vrot.lane.b32.xlu0 %v69, 111
    %v175 = vpop.permute.xlu0 %174
    %176 = vrot.lane.b32.xlu0 %v70, 111
    %v177 = vpop.permute.xlu0 %176
    %178 = vrot.lane.b32.xlu0 %v71, 111
    %v179 = vpop.permute.xlu0 %178
    %180 = vrot.lane.b32.xlu0 %v72, 111
    %v181 = vpop.permute.xlu0 %180
    %vm182 = vcmp.lt.s32.totalorder %v86, 111
    %v183 = vsel %vm182, %v179, %v181
    %v184 = vsel %vm182, %v177, %v179
    %v185 = vsel %vm182, %v175, %v177
    %v186 = vsel %vm182, %v173, %v175
    %v187 = vsel %vm182, %v171, %v173
    %v188 = vsel %vm182, %v181, %v171
    %189 = vrot.lane.b32.xlu0 %v67, 110
    %v190 = vpop.permute.xlu0 %189
    %191 = vrot.lane.b32.xlu0 %v68, 110
    %v192 = vpop.permute.xlu0 %191
    %193 = vrot.lane.b32.xlu0 %v69, 110
    %v194 = vpop.permute.xlu0 %193
    %195 = vrot.lane.b32.xlu0 %v70, 110
    %v196 = vpop.permute.xlu0 %195
    %197 = vrot.lane.b32.xlu0 %v71, 110
    %v198 = vpop.permute.xlu0 %197
    %199 = vrot.lane.b32.xlu0 %v72, 110
    %v200 = vpop.permute.xlu0 %199
    %vm201 = vcmp.lt.s32.totalorder %v86, 110
    %v202 = vsel %vm201, %v198, %v200
    %v203 = vsel %vm201, %v196, %v198
    %v204 = vsel %vm201, %v194, %v196
    %v205 = vsel %vm201, %v192, %v194
    %v206 = vsel %vm201, %v190, %v192
    %v207 = vsel %vm201, %v200, %v190
    %208 = vrot.lane.b32.xlu0 %v67, 109
    %v209 = vpop.permute.xlu0 %208
    %210 = vrot.lane.b32.xlu0 %v68, 109
    %v211 = vpop.permute.xlu0 %210
    %212 = vrot.lane.b32.xlu0 %v69, 109
    %v213 = vpop.permute.xlu0 %212
    %214 = vrot.lane.b32.xlu0 %v70, 109
    %v215 = vpop.permute.xlu0 %214
    %216 = vrot.lane.b32.xlu0 %v71, 109
    %v217 = vpop.permute.xlu0 %216
    %218 = vrot.lane.b32.xlu0 %v72, 109
    %v219 = vpop.permute.xlu0 %218
    %vm220 = vcmp.lt.s32.totalorder %v86, 109
    %v221 = vsel %vm220, %v217, %v219
    %v222 = vsel %vm220, %v215, %v217
    %v223 = vsel %vm220, %v213, %v215
    %v224 = vsel %vm220, %v211, %v213
    %v225 = vsel %vm220, %v209, %v211
    %v226 = vsel %vm220, %v219, %v209
    %v227 = vpack.c.bf16 %v112, %v93
    %v228 = vpack.c.bf16 %v111, %v92
    %v229 = vpack.c.bf16 %v110, %v91
    %v230 = vpack.c.bf16 %v109, %v90
    %v231 = vpack.c.bf16 %v108, %v89
    %v232 = vpack.c.bf16 %v107, %v88
    %v233 = vpack.c.bf16 %v150, %v131
    %v234 = vpack.c.bf16 %v149, %v130
    %v235 = vpack.c.bf16 %v148, %v129
    %v236 = vpack.c.bf16 %v147, %v128
    %v237 = vpack.c.bf16 %v146, %v127
    %v238 = vpack.c.bf16 %v145, %v126
    %v239 = vpack.c.bf16 %v168, %v67
    %v240 = vpack.c.bf16 %v167, %v68
    %v241 = vpack.c.bf16 %v166, %v69
    %v242 = vpack.c.bf16 %v165, %v70
    %v243 = vpack.c.bf16 %v164, %v71
    %v244 = vpack.c.bf16 %v169, %v72
    %v245 = vpack.c.bf16 %v206, %v187
    %v246 = vpack.c.bf16 %v205, %v186
    %v247 = vpack.c.bf16 %v204, %v185
    %v248 = vpack.c.bf16 %v203, %v184
    %v249 = vpack.c.bf16 %v202, %v183
    %v250 = vpack.c.bf16 %v207, %v188
    %v251 = vpack.c.bf16 %v225, %v225
    %v252 = vpack.c.bf16 %v224, %v224
    %v253 = vpack.c.bf16 %v223, %v223
    %v254 = vpack.c.bf16 %v222, %v222
    %v255 = vpack.c.bf16 %v221, %v221
    %v256 = vpack.c.bf16 %v226, %v226
    %v257 = vld [vmem:[#allocation5] sm:$0xf]
    %vm258 = vcmask 588800
    %v260 = vsel %vm258, %v257, 0
    %vm262 = vcmask 1043456
    %v264 = vsel %vm262, %v251, 0
    %v267 = vsel %vm262, %v252, 0
    %v270 = vsel %vm262, %v253, 0
    %v273 = vsel %vm262, %v254, 0
    %v276 = vsel %vm262, %v255, 0
    %v279 = vsel %vm262, %v256, 0
    %281 = vmatprep.subr.bf16.mxu0 0
    %282 = vmatpush1.bf16.msra.mxu0 0
    %283 = vmatprep.subr.bf16.mxu0 0
    %284 = vmatpush1.bf16.msra.mxu0 0
    %285 = vmatprep.subr.bf16.mxu0 0
    %286 = vmatpush1.bf16.msra.mxu0 0
    %287 = vmatprep.subr.bf16.mxu0 %v267
    %288 = vmatpush1.bf16.msra.mxu0 %v264
    %289 = vmatprep.subr.bf16.mxu0 %v246
    %290 = vmatpush1.bf16.msra.mxu0 %v245
    %291 = vmatprep.subr.bf16.mxu0 %v240
    %292 = vmatpush1.bf16.msra.mxu0 %v239
    %293 = vmatprep.subr.bf16.mxu0 %v234
    %294 = vmatpush1.bf16.msra.mxu0 %v233
    %295 = vmatprep.subr.bf16.mxu0 %v228
    %296 = vmatpush1.bf16.msra.mxu0 %v227
    %297 = vmatprep.subr.bf16.mxu0 0
    %298 = vmatpush2.bf16.msra.mxu0 0
    %299 = vmatprep.subr.bf16.mxu0 0
    %300 = vmatpush2.bf16.msra.mxu0 0
    %301 = vmatprep.subr.bf16.mxu0 0
    %302 = vmatpush2.bf16.msra.mxu0 0
    %303 = vmatprep.subr.bf16.mxu0 0
    %304 = vmatpush2.bf16.msra.mxu0 0
    %305 = vmatprep.subr.bf16.mxu0 0
    %306 = vmatpush2.bf16.msra.mxu0 0
    %307 = vmatprep.subr.bf16.mxu0 0
    %308 = vmatpush2.bf16.msra.mxu0 0
    %309 = vmatprep.subr.bf16.mxu0 0
    %310 = vmatpush2.bf16.msra.mxu0 0
    %311 = vmatprep.subr.bf16.mxu0 0
    %312 = vmatpush2.bf16.msra.mxu0 0
    %313 = vmatprep.mubr.bf16.mxu0 0
    %314 = vmatmul.mubr.bf16.gmra.mxu0 %v260
    %v315 = vpop.f32.mrf.mxu0
    %v316 = vadd.f32 0.0, %v315
    %v317 = vpop.f32.mrf.mxu0
    %v318 = vadd.f32 0.0, %v317
    %v319 = vpop.f32.mrf.mxu0
    %v320 = vpop.f32.mrf.mxu0
    %321 = vdwg.mxu0
    %322 = vmatprep.subr.bf16.mxu0 0
    %323 = vmatpush1.bf16.msra.mxu0 0
    %324 = vmatprep.subr.bf16.mxu0 0
    %325 = vmatpush1.bf16.msra.mxu0 0
    %326 = vmatprep.subr.bf16.mxu0 0
    %327 = vmatpush1.bf16.msra.mxu0 0
    %328 = vmatprep.subr.bf16.mxu0 %v273
    %329 = vmatpush1.bf16.msra.mxu0 %v270
    %330 = vmatprep.subr.bf16.mxu0 %v248
    %331 = vmatpush1.bf16.msra.mxu0 %v247
    %332 = vmatprep.subr.bf16.mxu0 %v242
    %333 = vmatpush1.bf16.msra.mxu0 %v241
    %334 = vmatprep.subr.bf16.mxu0 %v236
    %335 = vmatpush1.bf16.msra.mxu0 %v235
    %336 = vmatprep.subr.bf16.mxu0 %v230
    %337 = vmatpush1.bf16.msra.mxu0 %v229
    %338 = vmatprep.subr.bf16.mxu0 0
    %339 = vmatpush2.bf16.msra.mxu0 0
    %340 = vmatprep.subr.bf16.mxu0 0
    %341 = vmatpush2.bf16.msra.mxu0 0
    %342 = vmatprep.subr.bf16.mxu0 0
    %343 = vmatpush2.bf16.msra.mxu0 0
    %344 = vmatprep.subr.bf16.mxu0 0
    %345 = vmatpush2.bf16.msra.mxu0 0
    %346 = vmatprep.subr.bf16.mxu0 0
    %347 = vmatpush2.bf16.msra.mxu0 0
    %348 = vmatprep.subr.bf16.mxu0 0
    %349 = vmatpush2.bf16.msra.mxu0 0
    %350 = vmatprep.subr.bf16.mxu0 0
    %351 = vmatpush2.bf16.msra.mxu0 0
    %352 = vmatprep.subr.bf16.mxu0 0
    %353 = vmatpush2.bf16.msra.mxu0 0
    %354 = vmatprep.mubr.bf16.mxu0 0
    %355 = vmatmul.mubr.bf16.gmra.mxu0 %v260
    %v356 = vpop.f32.mrf.mxu0
    %v357 = vadd.f32 0.0, %v356
    %v358 = vpop.f32.mrf.mxu0
    %v359 = vadd.f32 0.0, %v358
    %v360 = vpop.f32.mrf.mxu0
    %v361 = vpop.f32.mrf.mxu0
    %362 = vdwg.mxu0
    %363 = vmatprep.subr.bf16.mxu0 0
    %364 = vmatpush1.bf16.msra.mxu0 0
    %365 = vmatprep.subr.bf16.mxu0 0
    %366 = vmatpush1.bf16.msra.mxu0 0
    %367 = vmatprep.subr.bf16.mxu0 0
    %368 = vmatpush1.bf16.msra.mxu0 0
    %369 = vmatprep.subr.bf16.mxu0 %v279
    %370 = vmatpush1.bf16.msra.mxu0 %v276
    %371 = vmatprep.subr.bf16.mxu0 %v250
    %372 = vmatpush1.bf16.msra.mxu0 %v249
    %373 = vmatprep.subr.bf16.mxu0 %v244
    %374 = vmatpush1.bf16.msra.mxu0 %v243
    %375 = vmatprep.subr.bf16.mxu0 %v238
    %376 = vmatpush1.bf16.msra.mxu0 %v237
    %377 = vmatprep.subr.bf16.mxu0 %v232
    %378 = vmatpush1.bf16.msra.mxu0 %v231
    %379 = vmatprep.subr.bf16.mxu0 0
    %380 = vmatpush2.bf16.msra.mxu0 0
    %381 = vmatprep.subr.bf16.mxu0 0
    %382 = vmatpush2.bf16.msra.mxu0 0
    %383 = vmatprep.subr.bf16.mxu0 0
    %384 = vmatpush2.bf16.msra.mxu0 0
    %385 = vmatprep.subr.bf16.mxu0 0
    %386 = vmatpush2.bf16.msra.mxu0 0
    %387 = vmatprep.subr.bf16.mxu0 0
    %388 = vmatpush2.bf16.msra.mxu0 0
    %389 = vmatprep.subr.bf16.mxu0 0
    %390 = vmatpush2.bf16.msra.mxu0 0
    %391 = vmatprep.subr.bf16.mxu0 0
    %392 = vmatpush2.bf16.msra.mxu0 0
    %393 = vmatprep.subr.bf16.mxu0 0
    %394 = vmatpush2.bf16.msra.mxu0 0
    %395 = vmatprep.mubr.bf16.mxu0 0
    %396 = vmatmul.mubr.bf16.gmra.mxu0 %v260
    %v397 = vpop.f32.mrf.mxu0
    %v398 = vadd.f32 0.0, %v397
    %v399 = vpop.f32.mrf.mxu0
    %v400 = vadd.f32 0.0, %v399
    %v401 = vpop.f32.mrf.mxu0
    %v402 = vpop.f32.mrf.mxu0
    %403 = vdwg.mxu0
    %v405 = vlaneseq
    %v406 = vshrl.u32 %v405, 7
    %v407 = vsub.s32 0, %v406
    %v408 = vrot.slane %v66, %v407
    %v409 = vlaneseq
    %v410 = vshrl.u32 %v409, 7
    %v411 = vsub.s32 1, %v410
    %v412 = vrot.slane %v66, %v411
    %v413 = vlaneseq
    %v414 = vshrl.u32 %v413, 7
    %v415 = vsub.s32 2, %v414
    %v416 = vrot.slane %v66, %v415
    %v417 = vlaneseq
    %v418 = vshrl.u32 %v417, 7
    %v419 = vsub.s32 3, %v418
    %v420 = vrot.slane %v66, %v419
    %v421 = vlaneseq
    %v422 = vshrl.u32 %v421, 7
    %v423 = vsub.s32 4, %v422
    %v424 = vrot.slane %v66, %v423
    %v425 = vlaneseq
    %v426 = vshrl.u32 %v425, 7
    %v427 = vsub.s32 5, %v426
    %v428 = vrot.slane %v66, %v427
    %v435 = vmul.f32 %v316, %v408
    %v436 = vmul.f32 %v318, %v412
    %v437 = vmul.f32 %v357, %v416
    %v438 = vmul.f32 %v359, %v420
    %v439 = vmul.f32 %v398, %v424
    %v440 = vmul.f32 %v400, %v428
    %v441 = vadd.f32 %v435, %v436
    %v442 = vadd.f32 %v441, %v437
    %v443 = vadd.f32 %v442, %v438
    %v444 = vadd.f32 %v443, %v439
    %v445 = vadd.f32 %v444, %v440
    %446 = vadd.xlane.f32.xlu0 %v445
    %v447 = vpop.xlane.xlu0 %446
    %v448 = vmul.f32 %v435, %v316
    %v449 = vmul.f32 %v436, %v318
    %v450 = vmul.f32 %v437, %v357
    %v451 = vmul.f32 %v438, %v359
    %v452 = vmul.f32 %v439, %v398
    %v453 = vmul.f32 %v440, %v400
    %v454 = vadd.f32 %v448, %v449
    %v455 = vadd.f32 %v454, %v450
    %v456 = vadd.f32 %v455, %v451
    %v457 = vadd.f32 %v456, %v452
    %v458 = vadd.f32 %v457, %v453
    %459 = vadd.xlane.f32.xlu0 %v458
    %v460 = vpop.xlane.xlu0 %459
    %v461 = vmul.f32 %v447, 0.001953125
    %v462 = vmul.f32 %v460, 0.001953125
    %v463 = vmul.f32 %v461, %v461
    %v464 = vsub.f32 %v462, %v463
    %v465 = vmax.f32 %v464, 0.0
    %v466 = vsub.f32 %v316, %v461
    %v467 = vsub.f32 %v318, %v461
    %v468 = vsub.f32 %v357, %v461
    %v469 = vsub.f32 %v359, %v461
    %v470 = vsub.f32 %v398, %v461
    %v471 = vsub.f32 %v400, %v461
    %v472 = vadd.f32 %v465, 1e-05
    %v473 = vrsqrt.pop %v472
    %v474 = vmul.f32 %v466, %v473
    %v475 = vmul.f32 %v467, %v473
    %v476 = vmul.f32 %v468, %v473
    %v477 = vmul.f32 %v469, %v473
    %v478 = vmul.f32 %v470, %v473
    %v479 = vmul.f32 %v471, %v473
    %v480 = vmax.f32 %v474, 0.0
    %v481 = vmax.f32 %v475, 0.0
    %v482 = vmax.f32 %v476, 0.0
    %v483 = vmax.f32 %v477, 0.0
    %v484 = vmax.f32 %v478, 0.0
    %v485 = vmax.f32 %v479, 0.0
    %v486 = vmul.f32 %v480, %v408
    %v487 = vmul.f32 %v481, %v412
    %v488 = vmul.f32 %v482, %v416
    %v489 = vmul.f32 %v483, %v420
    %v490 = vmul.f32 %v484, %v424
    %v491 = vmul.f32 %v485, %v428
    %492 = vrot.lane.b32.xlu0 %v486, 19
    %v493 = vpop.permute.xlu0 %492
    %494 = vrot.lane.b32.xlu0 %v487, 19
    %v495 = vpop.permute.xlu0 %494
    %496 = vrot.lane.b32.xlu0 %v488, 19
    %v497 = vpop.permute.xlu0 %496
    %498 = vrot.lane.b32.xlu0 %v489, 19
    %v499 = vpop.permute.xlu0 %498
    %500 = vrot.lane.b32.xlu0 %v490, 19
    %v501 = vpop.permute.xlu0 %500
    %502 = vrot.lane.b32.xlu0 %v491, 19
    %v503 = vpop.permute.xlu0 %502
    %v504 = vsel %vm87, %v501, %v503
    %v505 = vsel %vm87, %v499, %v501
    %v506 = vsel %vm87, %v497, %v499
    %v507 = vsel %vm87, %v495, %v497
    %v508 = vsel %vm87, %v493, %v495
    %v509 = vsel %vm87, %v503, %v493
    %510 = vrot.lane.b32.xlu0 %v486, 18
    %v511 = vpop.permute.xlu0 %510
    %512 = vrot.lane.b32.xlu0 %v487, 18
    %v513 = vpop.permute.xlu0 %512
    %514 = vrot.lane.b32.xlu0 %v488, 18
    %v515 = vpop.permute.xlu0 %514
    %516 = vrot.lane.b32.xlu0 %v489, 18
    %v517 = vpop.permute.xlu0 %516
    %518 = vrot.lane.b32.xlu0 %v490, 18
    %v519 = vpop.permute.xlu0 %518
    %520 = vrot.lane.b32.xlu0 %v491, 18
    %v521 = vpop.permute.xlu0 %520
    %v522 = vsel %vm106, %v519, %v521
    %v523 = vsel %vm106, %v517, %v519
    %v524 = vsel %vm106, %v515, %v517
    %v525 = vsel %vm106, %v513, %v515
    %v526 = vsel %vm106, %v511, %v513
    %v527 = vsel %vm106, %v521, %v511
    %528 = vrot.lane.b32.xlu0 %v486, 17
    %v529 = vpop.permute.xlu0 %528
    %530 = vrot.lane.b32.xlu0 %v487, 17
    %v531 = vpop.permute.xlu0 %530
    %532 = vrot.lane.b32.xlu0 %v488, 17
    %v533 = vpop.permute.xlu0 %532
    %534 = vrot.lane.b32.xlu0 %v489, 17
    %v535 = vpop.permute.xlu0 %534
    %536 = vrot.lane.b32.xlu0 %v490, 17
    %v537 = vpop.permute.xlu0 %536
    %538 = vrot.lane.b32.xlu0 %v491, 17
    %v539 = vpop.permute.xlu0 %538
    %v540 = vsel %vm125, %v537, %v539
    %v541 = vsel %vm125, %v535, %v537
    %v542 = vsel %vm125, %v533, %v535
    %v543 = vsel %vm125, %v531, %v533
    %v544 = vsel %vm125, %v529, %v531
    %v545 = vsel %vm125, %v539, %v529
    %546 = vrot.lane.b32.xlu0 %v486, 1
    %v547 = vpop.permute.xlu0 %546
    %548 = vrot.lane.b32.xlu0 %v487, 1
    %v549 = vpop.permute.xlu0 %548
    %550 = vrot.lane.b32.xlu0 %v488, 1
    %v551 = vpop.permute.xlu0 %550
    %552 = vrot.lane.b32.xlu0 %v489, 1
    %v553 = vpop.permute.xlu0 %552
    %554 = vrot.lane.b32.xlu0 %v490, 1
    %v555 = vpop.permute.xlu0 %554
    %556 = vrot.lane.b32.xlu0 %v491, 1
    %v557 = vpop.permute.xlu0 %556
    %v558 = vsel %vm144, %v555, %v557
    %v559 = vsel %vm144, %v553, %v555
    %v560 = vsel %vm144, %v551, %v553
    %v561 = vsel %vm144, %v549, %v551
    %v562 = vsel %vm144, %v547, %v549
    %v563 = vsel %vm144, %v557, %v547
    %564 = vrot.lane.b32.xlu0 %v486, 127
    %v565 = vpop.permute.xlu0 %564
    %566 = vrot.lane.b32.xlu0 %v487, 127
    %v567 = vpop.permute.xlu0 %566
    %568 = vrot.lane.b32.xlu0 %v488, 127
    %v569 = vpop.permute.xlu0 %568
    %570 = vrot.lane.b32.xlu0 %v489, 127
    %v571 = vpop.permute.xlu0 %570
    %572 = vrot.lane.b32.xlu0 %v490, 127
    %v573 = vpop.permute.xlu0 %572
    %574 = vrot.lane.b32.xlu0 %v491, 127
    %v575 = vpop.permute.xlu0 %574
    %v576 = vsel %vm163, %v573, %v575
    %v577 = vsel %vm163, %v571, %v573
    %v578 = vsel %vm163, %v569, %v571
    %v579 = vsel %vm163, %v567, %v569
    %v580 = vsel %vm163, %v565, %v567
    %v581 = vsel %vm163, %v575, %v565
    %582 = vrot.lane.b32.xlu0 %v486, 111
    %v583 = vpop.permute.xlu0 %582
    %584 = vrot.lane.b32.xlu0 %v487, 111
    %v585 = vpop.permute.xlu0 %584
    %586 = vrot.lane.b32.xlu0 %v488, 111
    %v587 = vpop.permute.xlu0 %586
    %588 = vrot.lane.b32.xlu0 %v489, 111
    %v589 = vpop.permute.xlu0 %588
    %590 = vrot.lane.b32.xlu0 %v490, 111
    %v591 = vpop.permute.xlu0 %590
    %592 = vrot.lane.b32.xlu0 %v491, 111
    %v593 = vpop.permute.xlu0 %592
    %v594 = vsel %vm182, %v591, %v593
    %v595 = vsel %vm182, %v589, %v591
    %v596 = vsel %vm182, %v587, %v589
    %v597 = vsel %vm182, %v585, %v587
    %v598 = vsel %vm182, %v583, %v585
    %v599 = vsel %vm182, %v593, %v583
    %600 = vrot.lane.b32.xlu0 %v486, 110
    %v601 = vpop.permute.xlu0 %600
    %602 = vrot.lane.b32.xlu0 %v487, 110
    %v603 = vpop.permute.xlu0 %602
    %604 = vrot.lane.b32.xlu0 %v488, 110
    %v605 = vpop.permute.xlu0 %604
    %606 = vrot.lane.b32.xlu0 %v489, 110
    %v607 = vpop.permute.xlu0 %606
    %608 = vrot.lane.b32.xlu0 %v490, 110
    %v609 = vpop.permute.xlu0 %608
    %610 = vrot.lane.b32.xlu0 %v491, 110
    %v611 = vpop.permute.xlu0 %610
    %v612 = vsel %vm201, %v609, %v611
    %v613 = vsel %vm201, %v607, %v609
    %v614 = vsel %vm201, %v605, %v607
    %v615 = vsel %vm201, %v603, %v605
    %v616 = vsel %vm201, %v601, %v603
    %v617 = vsel %vm201, %v611, %v601
    %618 = vrot.lane.b32.xlu0 %v486, 109
    %v619 = vpop.permute.xlu0 %618
    %620 = vrot.lane.b32.xlu0 %v487, 109
    %v621 = vpop.permute.xlu0 %620
    %622 = vrot.lane.b32.xlu0 %v488, 109
    %v623 = vpop.permute.xlu0 %622
    %624 = vrot.lane.b32.xlu0 %v489, 109
    %v625 = vpop.permute.xlu0 %624
    %626 = vrot.lane.b32.xlu0 %v490, 109
    %v627 = vpop.permute.xlu0 %626
    %628 = vrot.lane.b32.xlu0 %v491, 109
    %v629 = vpop.permute.xlu0 %628
    %v630 = vsel %vm220, %v627, %v629
    %v631 = vsel %vm220, %v625, %v627
    %v632 = vsel %vm220, %v623, %v625
    %v633 = vsel %vm220, %v621, %v623
    %v634 = vsel %vm220, %v619, %v621
    %v635 = vsel %vm220, %v629, %v619
    %v636 = vpack.c.bf16 %v527, %v509
    %v637 = vpack.c.bf16 %v526, %v508
    %v638 = vpack.c.bf16 %v525, %v507
    %v639 = vpack.c.bf16 %v524, %v506
    %v640 = vpack.c.bf16 %v523, %v505
    %v641 = vpack.c.bf16 %v522, %v504
    %v642 = vpack.c.bf16 %v563, %v545
    %v643 = vpack.c.bf16 %v562, %v544
    %v644 = vpack.c.bf16 %v561, %v543
    %v645 = vpack.c.bf16 %v560, %v542
    %v646 = vpack.c.bf16 %v559, %v541
    %v647 = vpack.c.bf16 %v558, %v540
    %v648 = vpack.c.bf16 %v580, %v486
    %v649 = vpack.c.bf16 %v579, %v487
    %v650 = vpack.c.bf16 %v578, %v488
    %v651 = vpack.c.bf16 %v577, %v489
    %v652 = vpack.c.bf16 %v576, %v490
    %v653 = vpack.c.bf16 %v581, %v491
    %v654 = vpack.c.bf16 %v616, %v598
    %v655 = vpack.c.bf16 %v615, %v597
    %v656 = vpack.c.bf16 %v614, %v596
    %v657 = vpack.c.bf16 %v613, %v595
    %v658 = vpack.c.bf16 %v612, %v594
    %v659 = vpack.c.bf16 %v617, %v599
    %v660 = vpack.c.bf16 %v634, %v634
    %v661 = vpack.c.bf16 %v633, %v633
    %v662 = vpack.c.bf16 %v632, %v632
    %v663 = vpack.c.bf16 %v631, %v631
    %v664 = vpack.c.bf16 %v630, %v630
    %v665 = vpack.c.bf16 %v635, %v635
    %v666 = vld [vmem:[#allocation7] sm:$0xf]
    %v668 = vsel %vm258, %v666, 0
    %v671 = vsel %vm262, %v660, 0
    %v674 = vsel %vm262, %v661, 0
    %v677 = vsel %vm262, %v662, 0
    %v680 = vsel %vm262, %v663, 0
    %v683 = vsel %vm262, %v664, 0
    %v686 = vsel %vm262, %v665, 0
    %688 = vmatprep.subr.bf16.mxu0 0
    %689 = vmatpush1.bf16.msra.mxu0 0
    %690 = vmatprep.subr.bf16.mxu0 0
    %691 = vmatpush1.bf16.msra.mxu0 0
    %692 = vmatprep.subr.bf16.mxu0 0
    %693 = vmatpush1.bf16.msra.mxu0 0
    %694 = vmatprep.subr.bf16.mxu0 %v674
    %695 = vmatpush1.bf16.msra.mxu0 %v671
    %696 = vmatprep.subr.bf16.mxu0 %v655
    %697 = vmatpush1.bf16.msra.mxu0 %v654
    %698 = vmatprep.subr.bf16.mxu0 %v649
    %699 = vmatpush1.bf16.msra.mxu0 %v648
    %700 = vmatprep.subr.bf16.mxu0 %v643
    %701 = vmatpush1.bf16.msra.mxu0 %v642
    %702 = vmatprep.subr.bf16.mxu0 %v637
    %703 = vmatpush1.bf16.msra.mxu0 %v636
    %704 = vmatprep.subr.bf16.mxu0 0
    %705 = vmatpush2.bf16.msra.mxu0 0
    %706 = vmatprep.subr.bf16.mxu0 0
    %707 = vmatpush2.bf16.msra.mxu0 0
    %708 = vmatprep.subr.bf16.mxu0 0
    %709 = vmatpush2.bf16.msra.mxu0 0
    %710 = vmatprep.subr.bf16.mxu0 0
    %711 = vmatpush2.bf16.msra.mxu0 0
    %712 = vmatprep.subr.bf16.mxu0 0
    %713 = vmatpush2.bf16.msra.mxu0 0
    %714 = vmatprep.subr.bf16.mxu0 0
    %715 = vmatpush2.bf16.msra.mxu0 0
    %716 = vmatprep.subr.bf16.mxu0 0
    %717 = vmatpush2.bf16.msra.mxu0 0
    %718 = vmatprep.subr.bf16.mxu0 0
    %719 = vmatpush2.bf16.msra.mxu0 0
    %720 = vmatprep.mubr.bf16.mxu0 0
    %721 = vmatmul.mubr.bf16.gmra.mxu0 %v668
    %v722 = vpop.f32.mrf.mxu0
    %v723 = vadd.f32 0.0, %v722
    %v724 = vpop.f32.mrf.mxu0
    %v725 = vadd.f32 0.0, %v724
    %v726 = vpop.f32.mrf.mxu0
    %v727 = vpop.f32.mrf.mxu0
    %728 = vdwg.mxu0
    %729 = vmatprep.subr.bf16.mxu0 0
    %730 = vmatpush1.bf16.msra.mxu0 0
    %731 = vmatprep.subr.bf16.mxu0 0
    %732 = vmatpush1.bf16.msra.mxu0 0
    %733 = vmatprep.subr.bf16.mxu0 0
    %734 = vmatpush1.bf16.msra.mxu0 0
    %735 = vmatprep.subr.bf16.mxu0 %v680
    %736 = vmatpush1.bf16.msra.mxu0 %v677
    %737 = vmatprep.subr.bf16.mxu0 %v657
    %738 = vmatpush1.bf16.msra.mxu0 %v656
    %739 = vmatprep.subr.bf16.mxu0 %v651
    %740 = vmatpush1.bf16.msra.mxu0 %v650
    %741 = vmatprep.subr.bf16.mxu0 %v645
    %742 = vmatpush1.bf16.msra.mxu0 %v644
    %743 = vmatprep.subr.bf16.mxu0 %v639
    %744 = vmatpush1.bf16.msra.mxu0 %v638
    %745 = vmatprep.subr.bf16.mxu0 0
    %746 = vmatpush2.bf16.msra.mxu0 0
    %747 = vmatprep.subr.bf16.mxu0 0
    %748 = vmatpush2.bf16.msra.mxu0 0
    %749 = vmatprep.subr.bf16.mxu0 0
    %750 = vmatpush2.bf16.msra.mxu0 0
    %751 = vmatprep.subr.bf16.mxu0 0
    %752 = vmatpush2.bf16.msra.mxu0 0
    %753 = vmatprep.subr.bf16.mxu0 0
    %754 = vmatpush2.bf16.msra.mxu0 0
    %755 = vmatprep.subr.bf16.mxu0 0
    %756 = vmatpush2.bf16.msra.mxu0 0
    %757 = vmatprep.subr.bf16.mxu0 0
    %758 = vmatpush2.bf16.msra.mxu0 0
    %759 = vmatprep.subr.bf16.mxu0 0
    %760 = vmatpush2.bf16.msra.mxu0 0
    %761 = vmatprep.mubr.bf16.mxu0 0
    %762 = vmatmul.mubr.bf16.gmra.mxu0 %v668
    %v763 = vpop.f32.mrf.mxu0
    %v764 = vadd.f32 0.0, %v763
    %v765 = vpop.f32.mrf.mxu0
    %v766 = vadd.f32 0.0, %v765
    %v767 = vpop.f32.mrf.mxu0
    %v768 = vpop.f32.mrf.mxu0
    %769 = vdwg.mxu0
    %770 = vmatprep.subr.bf16.mxu0 0
    %771 = vmatpush1.bf16.msra.mxu0 0
    %772 = vmatprep.subr.bf16.mxu0 0
    %773 = vmatpush1.bf16.msra.mxu0 0
    %774 = vmatprep.subr.bf16.mxu0 0
    %775 = vmatpush1.bf16.msra.mxu0 0
    %776 = vmatprep.subr.bf16.mxu0 %v686
    %777 = vmatpush1.bf16.msra.mxu0 %v683
    %778 = vmatprep.subr.bf16.mxu0 %v659
    %779 = vmatpush1.bf16.msra.mxu0 %v658
    %780 = vmatprep.subr.bf16.mxu0 %v653
    %781 = vmatpush1.bf16.msra.mxu0 %v652
    %782 = vmatprep.subr.bf16.mxu0 %v647
    %783 = vmatpush1.bf16.msra.mxu0 %v646
    %784 = vmatprep.subr.bf16.mxu0 %v641
    %785 = vmatpush1.bf16.msra.mxu0 %v640
    %786 = vmatprep.subr.bf16.mxu0 0
    %787 = vmatpush2.bf16.msra.mxu0 0
    %788 = vmatprep.subr.bf16.mxu0 0
    %789 = vmatpush2.bf16.msra.mxu0 0
    %790 = vmatprep.subr.bf16.mxu0 0
    %791 = vmatpush2.bf16.msra.mxu0 0
    %792 = vmatprep.subr.bf16.mxu0 0
    %793 = vmatpush2.bf16.msra.mxu0 0
    %794 = vmatprep.subr.bf16.mxu0 0
    %795 = vmatpush2.bf16.msra.mxu0 0
    %796 = vmatprep.subr.bf16.mxu0 0
    %797 = vmatpush2.bf16.msra.mxu0 0
    %798 = vmatprep.subr.bf16.mxu0 0
    %799 = vmatpush2.bf16.msra.mxu0 0
    %800 = vmatprep.subr.bf16.mxu0 0
    %801 = vmatpush2.bf16.msra.mxu0 0
    %802 = vmatprep.mubr.bf16.mxu0 0
    %803 = vmatmul.mubr.bf16.gmra.mxu0 %v668
    %v804 = vpop.f32.mrf.mxu0
    %v805 = vadd.f32 0.0, %v804
    %v806 = vpop.f32.mrf.mxu0
    %v807 = vadd.f32 0.0, %v806
    %v808 = vpop.f32.mrf.mxu0
    %v809 = vpop.f32.mrf.mxu0
    %810 = vdwg.mxu0
    %v811 = vmul.f32 %v723, %v408
    %v812 = vmul.f32 %v725, %v412
    %v813 = vmul.f32 %v764, %v416
    %v814 = vmul.f32 %v766, %v420
    %v815 = vmul.f32 %v805, %v424
    %v816 = vmul.f32 %v807, %v428
    %v817 = vadd.f32 %v811, %v812
    %v818 = vadd.f32 %v817, %v813
    %v819 = vadd.f32 %v818, %v814
    %v820 = vadd.f32 %v819, %v815
    %v821 = vadd.f32 %v820, %v816
    %822 = vadd.xlane.f32.xlu0 %v821
    %v823 = vpop.xlane.xlu0 %822
    %v824 = vmul.f32 %v811, %v723
    %v825 = vmul.f32 %v812, %v725
    %v826 = vmul.f32 %v813, %v764
    %v827 = vmul.f32 %v814, %v766
    %v828 = vmul.f32 %v815, %v805
    %v829 = vmul.f32 %v816, %v807
    %v830 = vadd.f32 %v824, %v825
    %v831 = vadd.f32 %v830, %v826
    %v832 = vadd.f32 %v831, %v827
    %v833 = vadd.f32 %v832, %v828
    %v834 = vadd.f32 %v833, %v829
    %835 = vadd.xlane.f32.xlu0 %v834
    %v836 = vpop.xlane.xlu0 %835
    %v837 = vmul.f32 %v823, 0.001953125
    %v838 = vmul.f32 %v836, 0.001953125
    %v839 = vmul.f32 %v837, %v837
    %v840 = vsub.f32 %v838, %v839
    %v841 = vmax.f32 %v840, 0.0
    %v842 = vsub.f32 %v723, %v837
    %v843 = vsub.f32 %v725, %v837
    %v844 = vsub.f32 %v764, %v837
    %v845 = vsub.f32 %v766, %v837
    %v846 = vsub.f32 %v805, %v837
    %v847 = vsub.f32 %v807, %v837
    %v848 = vadd.f32 %v841, 1e-05
    %v849 = vrsqrt.pop %v848
    %v850 = vmul.f32 %v842, %v849
    %v851 = vmul.f32 %v843, %v849
    %v852 = vmul.f32 %v844, %v849
    %v853 = vmul.f32 %v845, %v849
    %v854 = vmul.f32 %v846, %v849
    %v855 = vmul.f32 %v847, %v849
    %v856 = vmax.f32 %v850, 0.0
    %v857 = vmax.f32 %v851, 0.0
    %v858 = vmax.f32 %v852, 0.0
    %v859 = vmax.f32 %v853, 0.0
    %v860 = vmax.f32 %v854, 0.0
    %v861 = vmax.f32 %v855, 0.0
    %v862 = vmul.f32 %v856, %v408
    %v863 = vmul.f32 %v857, %v412
    %v864 = vmul.f32 %v858, %v416
    %v865 = vmul.f32 %v859, %v420
    %v866 = vmul.f32 %v860, %v424
    %v867 = vmul.f32 %v861, %v428
    %868 = vst [vmem:[#allocation10] sm:$0xff] %v862
    %869 = vst [vmem:[#allocation10 + $0x8] sm:$0xff] %v863
    %870 = vst [vmem:[#allocation10 + $0x10] sm:$0xff] %v864
    %871 = vst [vmem:[#allocation10 + $0x18] sm:$0xff] %v865
    %872 = vst [vmem:[#allocation10 + $0x20] sm:$0xff] %v866
    %873 = vst [vmem:[#allocation10 + $0x28] sm:$0xff] %v867
    // Predicated region
    $region34: #{tpu_custom_call.1} parent=1 // pred_check
      _
    $region35: #{tpu_custom_call.1} parent=1 // pred_check_branch
      %875 = sbr.rel (0) target = $region37
    $region36: #{tpu_custom_call.1} parent=1 // pred_region
      %s877 = ssub.s32 768, 768
      %878 = vsyncadd [#allocation4], %s877
      %s880 = sshll.u32 [#allocation10], 4
      %s881 = int_to_ptr.vmem [resolvable:$true] %s880
      %883 = dma.vmem_to_hbm [thread:$0]  %s881, 768, %s4, [#allocation4]
    $region37: #{tpu_custom_call.1} parent=1 // pred_fallthru
      _
    // Predicated region
    $region38: #{tpu_custom_call.1} parent=1 // pred_check
      _
    $region39: #{tpu_custom_call.1} parent=1 // pred_check_branch
      %885 = sbr.rel (0) target = $region41
    $region40: #{tpu_custom_call.1} parent=1 // pred_region
      %886 = dma.done [#allocation4], 768
    $region41: #{tpu_custom_call.1} parent=1 // pred_fallthru
      _
    %887 = vsyncpa [#allocation3], 1
    %888 = vsyncpa [#allocation6], 1
    %889 = vsyncpa [#allocation9], 1
    %890 = vsyncpa [#allocation4], 1

</llo_original>
